<compile_context>
chip_gen: v7x
topology: tpu7x:2x2x1
jax: 0.10.0
libtpu: 0.0.40
codegen_flags: <defaults>
</compile_context>

<pallas_src>
import math

import jax
import jax.numpy as jnp
from jax.experimental import pallas as pl
from jax.experimental.pallas import tpu as pltpu


def _round_up(x, m):
    return ((x + m - 1) // m) * m


def _make_conv_kernel(*, qs, with_stats):
    """Conv1d tile kernel (tap-group accumulation, no im2col).

    x_ref:     (s*C_in, T)          bf16  phase-split main input tile
    halo_ref:  (s*C_in, H)          bf16  first H columns of the next tile
    w_ref:     (n_q, C_out, s*C_in) bf16  tap-group weights
    b_ref:     (C_out, 1)           f32   bias
    o_ref:     (C_out, T)           conv(+bias) output tile
    stats_ref: (2, T)               f32   per-tile (channel-sum, channel-sumsq)
    """

    def kernel(x_ref, halo_ref, w_ref, b_ref, o_ref, *rest):
        acc = None
        for gi, q in enumerate(qs):
            if q == 0:
                xq = x_ref[...]                       # no shift needed
            else:
                # shifted operand: (T-q) lanes from this tile + q halo lanes
                xq = jnp.concatenate([x_ref[:, q:], halo_ref[:, :q]], axis=-1)
            part = jnp.dot(w_ref[gi], xq, preferred_element_type=jnp.float32)
            acc = part if acc is None else acc + part
        acc = acc + b_ref[...]
        o_ref[...] = acc.astype(o_ref.dtype)

        if with_stats:
            stats_ref = rest[0]
            # Per-tile partial GroupNorm stats (rows written separately, no
            # concat); padded tail columns are sliced off in the JAX finalize.
            stats_ref[0:1, :] = jnp.sum(acc, axis=0, keepdims=True)
            stats_ref[1:2, :] = jnp.sum(acc * acc, axis=0, keepdims=True)

    return kernel


def _gn_apply_kernel(y_ref, scale_ref, shift_ref, o_ref):
    # Second pass of the tiling-aware GroupNorm: y * scale + shift with
    # per-(sample, channel) scale/shift precomputed from the global stats.
    # TODO(synk): ideally this apply is fused into the next consumer (ELU /
    # next conv input cast) instead of a standalone pass.
    y = y_ref[...].astype(jnp.float32)
    o_ref[...] = (y * scale_ref[...] + shift_ref[...]).astype(o_ref.dtype)


class EncodecConv1dPallas:
    """JAX/Pallas re-implementation of transformers EncodecConv1d.forward."""

    def __init__(self, key, config, in_channels, out_channels, kernel_size,
                 stride=1, dilation=1, tile_t=None, max_tile_t=2048,
                 out_dtype=jnp.bfloat16):
        self.causal = config["use_causal_conv"]
        self.pad_mode = config["pad_mode"]
        self.norm_type = config["norm_type"]
        if self.norm_type not in ("weight_norm", "time_group_norm"):
            raise ValueError(f"bad norm_type {self.norm_type}")

        self.in_channels = in_channels
        self.out_channels = out_channels
        self.ksize = kernel_size
        self.stride = stride
        self.dilation = dilation
        self.tile_t = tile_t              # None -> auto (VMEM-budget based)
        self.max_tile_t = int(max_tile_t)
        self.out_dtype = out_dtype        # bf16 by default; f32 for parity tests

        # effective receptive field, as in the torch module's buffers
        self.kernel_eff = (kernel_size - 1) * dilation + 1
        self.padding_total = self.kernel_eff - stride

        k1, k2, k3, k4, k5 = jax.random.split(key, 5)
        v = 0.2 * jax.random.normal(
            k1, (out_channels, in_channels, kernel_size), jnp.float32)
        if self.norm_type == "weight_norm":
            # weight_norm parametrization: w = g * v / ||v||_(in,k)
            g = jax.random.uniform(k2, (out_channels, 1, 1), jnp.float32, 0.5, 1.5)
            norm_v = jnp.sqrt(jnp.sum(v * v, axis=(1, 2), keepdims=True))
            self.weight = g * v / norm_v
        else:
            self.weight = v
        self.bias = 0.1 * jax.random.normal(k3, (out_channels,), jnp.float32)

        if self.norm_type == "time_group_norm":
            self.gn_gamma = jax.random.uniform(
                k4, (out_channels,), jnp.float32, 0.5, 1.5)
            self.gn_beta = 0.1 * jax.random.normal(k5, (out_channels,), jnp.float32)
        else:
            self.gn_gamma = jnp.ones((out_channels,), jnp.float32)
            self.gn_beta = jnp.zeros((out_channels,), jnp.float32)
        self.gn_eps = 1e-5

        # Tap groups for the phase-split layout: output column t, tap k reads
        # phase p=(k*d)%s at phase-column t+q with q=(k*d)//s.  Group taps by
        # q so each group is one deep (C_out, s*C_in) x (s*C_in, T) matmul.
        s, dil, K = stride, dilation, kernel_size
        qs = sorted({(k * dil) // s for k in range(K)})
        self.qs = qs
        q_index = {q: i for i, q in enumerate(qs)}
        wg = jnp.zeros((len(qs), out_channels, s, in_channels), jnp.float32)
        for k in range(K):
            p, q = (k * dil) % s, (k * dil) // s
            wg = wg.at[q_index[q], :, p, :].set(self.weight[:, :, k])
        self.w_groups = wg.reshape(len(qs), out_channels, s * in_channels
                                   ).astype(jnp.bfloat16)
        self.bias2d = self.bias.reshape(out_channels, 1).astype(jnp.float32)

    # ---- padding glue (mirrors the torch module exactly) -----------------
    def _extra_padding(self, length):
        n_frames = (length - self.kernel_eff + self.padding_total) / self.stride + 1
        n_frames = math.ceil(n_frames) - 1
        ideal_length = n_frames * self.stride + self.kernel_eff - self.padding_total
        return ideal_length - length

    @staticmethod
    def _pad1d(x, paddings, mode="zero", value=0.0):
        length = x.shape[-1]
        pad_left, pad_right = paddings
        lead = [(0, 0)] * (x.ndim - 1)
        if mode != "reflect":
            jmode = {"zero": "constant", "constant": "constant",
                     "replicate": "edge", "circular": "wrap"}[mode]
            if jmode == "constant":
                return jnp.pad(x, lead + [(pad_left, pad_right)],
                               mode="constant", constant_values=value)
            return jnp.pad(x, lead + [(pad_left, pad_right)], mode=jmode)
        max_pad = max(pad_left, pad_right)
        extra_pad = 0
        if length <= max_pad:
            extra_pad = max_pad - length + 1
            x = jnp.pad(x, lead + [(0, extra_pad)])
        padded = jnp.pad(x, lead + [(pad_left, pad_right)], mode="reflect")
        end = padded.shape[-1] - extra_pad
        return padded[..., :end]

    # ---- VMEM / tile sizing -----------------------------------------------
    @staticmethod
    def _tile_bytes(rows, cols, itemsize):
        return _round_up(max(rows, 1), 8) * _round_up(max(cols, 1), 128) * itemsize

    def _vmem_estimate(self, T, H, sC, n_q, with_stats, out_isz):
        C_out = self.out_channels
        pb = self._tile_bytes
        est = 0
        est += 2 * pb(sC, T, 2)                 # main tile (double-buffered)
        est += 2 * pb(sC, H, 2)                 # halo tile
        est += 2 * n_q * pb(C_out, sC, 2)       # grouped weight (resident)
        est += 2 * pb(C_out, 1, 4)              # bias
        est += 2 * pb(C_out, T, out_isz)        # conv output tile
        if with_stats:
            est += 2 * pb(2, T, 4)              # per-tile stats
        # in-kernel temporaries: shifted operand + f32 accumulator (+ copy)
        est += 2 * pb(sC, T, 2) + 2 * pb(C_out, T, 4)
        return est

    @staticmethod
    def _vmem_budget():
        phys = None
        try:
            info = pltpu.get_tpu_info()
            phys = getattr(info, "vmem_capacity_bytes", None)
        except Exception:
            phys = None
        if not phys:
            phys = 64 << 20                     # conservative: v7x-sized VMEM
        # ~40 MiB tiling budget on 64-MiB parts (v7x), ~64 MiB on 128-MiB
        # parts (v5e/v6e).
        return (40 << 20) if phys <= (80 << 20) else (64 << 20)

    def _pick_tile(self, H, sC, n_q, L_out, with_stats, out_isz):
        if self.tile_t is not None:
            return max(H, min(_round_up(self.tile_t, H), _round_up(L_out, H)))
        cap = max(H, min(_round_up(self.max_tile_t, H), _round_up(L_out, H)))
        budget = self._vmem_budget()
        t, best = H, H
        while t <= cap:
            if self._vmem_estimate(t, H, sC, n_q, with_stats, out_isz) <= budget:
                best = t
            t += H
        return best

    def _vmem_limit(self, T, H, sC, n_q, with_stats, out_isz):
        est = self._vmem_estimate(T, H, sC, n_q, with_stats, out_isz)
        return int(min(max(est + (8 << 20), 32 << 20), 120 << 20))

    # ---- forward ----------------------------------------------------------
    def __call__(self, hidden_states):
        x = hidden_states.astype(jnp.float32)
        B, C_in, L = x.shape
        assert C_in == self.in_channels
        K, C_out = self.ksize, self.out_channels
        s, d = self.stride, self.dilation

        # Module-faithful padding (plain JAX glue).
        extra = self._extra_padding(L)
        if self.causal:
            xp = self._pad1d(x, (self.padding_total, extra), mode=self.pad_mode)
        else:
            pad_r = self.padding_total // 2
            pad_l = self.padding_total - pad_r
            xp = self._pad1d(x, (pad_l, pad_r + extra), mode=self.pad_mode)
        L_pad = xp.shape[-1]
        L_out = (L_pad - self.kernel_eff) // s + 1
        assert L_out >= 1

        with_stats = self.norm_type == "time_group_norm"
        conv_dtype = jnp.bfloat16 if with_stats else jnp.dtype(self.out_dtype)
        out_isz = jnp.dtype(conv_dtype).itemsize
        sC = s * C_in
        n_q = len(self.qs)

        # -------- static tiling geometry (all Python ints) ----------------
        Q = ((K - 1) * d) // s                 # max in-tile tap offset
        H = _round_up(max(Q, 1), 128)          # halo block width (>= 128)
        T = self._pick_tile(H, sC, n_q, L_out, with_stats, out_isz)
        assert T % H == 0 and T % 128 == 0
        n_t = -(-L_out // T)
        L_out_pad = n_t * T
        L_phase_pad = L_out_pad + H            # room for the last tile's halo
        vmem_limit = self._vmem_limit(T, H, sC, n_q, with_stats, out_isz)

        # -------- phase-split (stride-fold) layout, no K-fold duplication --
        target = s * L_phase_pad
        if target >= L_pad:
            xp = jnp.pad(xp, ((0, 0), (0, 0), (0, target - L_pad)))
        else:
            xp = xp[..., :target]              # tail never read by valid outputs
        if s == 1:
            x_ps = xp.astype(jnp.bfloat16)
        else:
            # TODO(synk): this transpose is an extra HBM pass over the input;
            # emitting the phase-split layout from the producing layer (or
            # strided in-kernel loads) would remove it.
            x_ps = (xp.reshape(B, C_in, L_phase_pad, s)
                      .transpose(0, 3, 1, 2)
                      .reshape(B, sC, L_phase_pad)
                      .astype(jnp.bfloat16))

        # TODO(synk): for tiny-channel layers, folding the batch dim into the
        # time/lane axis (grid = time-tiles only) would cut grid-step overhead
        # by B; skipped here to keep halo handling at batch boundaries simple.
        kernel = _make_conv_kernel(qs=self.qs, with_stats=with_stats)

        in_specs = [
            # main tile: phase columns [j*T, j*T + T)
            pl.BlockSpec((None, sC, T), lambda b, j: (b, 0, j)),
            # halo: first H columns of the next tile, same array (Blocked idx)
            pl.BlockSpec((None, sC, H), lambda b, j: (b, 0, (j + 1) * (T // H))),
            # grouped weight + bias stay resident (constant index_map)
            pl.BlockSpec((n_q, C_out, sC), lambda b, j: (0, 0, 0)),
            pl.BlockSpec((C_out, 1), lambda b, j: (0, 0)),
        ]
        out_shape = [jax.ShapeDtypeStruct((B, C_out, L_out_pad), conv_dtype)]
        out_specs = [pl.BlockSpec((None, C_out, T), lambda b, j: (b, 0, j))]
        if with_stats:
            # Per-tile partial stats (lane-dense), no cross-tile accumulator,
            # so both grid axes stay "parallel" even at batch=1.
            out_shape.append(jax.ShapeDtypeStruct((B, 2, L_out_pad), jnp.float32))
            out_specs.append(pl.BlockSpec((None, 2, T), lambda b, j: (b, 0, j)))

        outs = pl.pallas_call(
            kernel,
            out_shape=tuple(out_shape),
            grid=(B, n_t),
            in_specs=in_specs,
            out_specs=tuple(out_specs),
            compiler_params=pltpu.CompilerParams(
                dimension_semantics=("parallel", "parallel"),
                vmem_limit_bytes=vmem_limit),
        )(x_ps, x_ps, self.w_groups, self.bias2d)

        if not with_stats:
            return outs[0][..., :L_out]

        # -------- time_group_norm finalize (two-pass, tiling-aware) -------
        y_pad, stats = outs
        n_elem = float(C_out) * float(L_out)
        tot = jnp.sum(stats[:, :, :L_out], axis=-1)       # (B, 2) f32
        mean = tot[:, 0] / n_elem
        # TODO(synk): E[x^2]-mean^2 in f32 can lose precision for very long
        # audio; a compensated / Welford-style combine of the per-tile stats
        # in this JAX finalize would be more robust.
        var = jnp.maximum(tot[:, 1] / n_elem - mean * mean, 0.0)
        inv_std = jax.lax.rsqrt(var + self.gn_eps)        # (B,)
        scale = (inv_std[:, None] * self.gn_gamma[None, :]).reshape(B, C_out, 1)
        shift = (self.gn_beta[None, :]
                 - (mean * inv_std)[:, None] * self.gn_gamma[None, :]
                 ).reshape(B, C_out, 1)

        alias = {0: 0} if y_pad.dtype == jnp.dtype(self.out_dtype) else {}
        out_pad = pl.pallas_call(
            _gn_apply_kernel,
            out_shape=jax.ShapeDtypeStruct((B, C_out, L_out_pad), self.out_dtype),
            grid=(B, n_t),
            in_specs=[
                pl.BlockSpec((None, C_out, T), lambda b, j: (b, 0, j)),
                pl.BlockSpec((None, C_out, 1), lambda b, j: (b, 0, 0)),
                pl.BlockSpec((None, C_out, 1), lambda b, j: (b, 0, 0)),
            ],
            out_specs=pl.BlockSpec((None, C_out, T), lambda b, j: (b, 0, j)),
            input_output_aliases=alias,
            compiler_params=pltpu.CompilerParams(
                dimension_semantics=("parallel", "parallel"),
                vmem_limit_bytes=vmem_limit),
        )(y_pad, scale, shift)
        return out_pad[..., :L_out]


# ---- pure-JAX reference (true f32 module semantics) --------------------------
def reference_forward(m, x):
    x = x.astype(jnp.float32)
    extra = m._extra_padding(x.shape[-1])
    if m.causal:
        xp = m._pad1d(x, (m.padding_total, extra), mode=m.pad_mode)
    else:
        pad_r = m.padding_total // 2
        pad_l = m.padding_total - pad_r
        xp = m._pad1d(x, (pad_l, pad_r + extra), mode=m.pad_mode)
    y = jax.lax.conv_general_dilated(
        xp, m.weight, window_strides=(m.stride,), padding="VALID",
        rhs_dilation=(m.dilation,),
        dimension_numbers=("NCH", "OIH", "NCH"))
    y = y + m.bias.reshape(1, -1, 1)
    if m.norm_type == "time_group_norm":
        mean = jnp.mean(y, axis=(1, 2), keepdims=True)
        var = jnp.mean((y - mean) ** 2, axis=(1, 2), keepdims=True)
        y = (y - mean) / jnp.sqrt(var + m.gn_eps)
        y = y * m.gn_gamma.reshape(1, -1, 1) + m.gn_beta.reshape(1, -1, 1)
    return y


def _check(y, r, name):
    y = jnp.asarray(y, jnp.float32)
    assert y.shape == r.shape, (name, y.shape, r.shape)
    err = float(jnp.max(jnp.abs(y - r)))
    # bf16 MXU operands + bf16 activations vs f32 reference -> loose-ish tol.
    assert jnp.allclose(y, r, atol=5e-2, rtol=5e-2), (name, err)


if __name__ == "__main__":
    key = jax.random.PRNGKey(0)
    k1, k2, k3, kx1, kx2, kx3 = jax.random.split(key, 6)

    # Case 1: causal, reflect pad, weight_norm (EnCodec first-layer style),
    # single time tile (auto tile sizing).
    cfg1 = dict(use_causal_conv=True, pad_mode="reflect", norm_type="weight_norm")
    m1 = EncodecConv1dPallas(k1, cfg1, in_channels=4, out_channels=8,
                             kernel_size=7, stride=1, dilation=1)
    x1 = jax.random.normal(kx1, (2, 4, 32), jnp.float32)
    y1 = jax.jit(m1.__call__)(x1)
    jax.block_until_ready(y1)
    _check(y1, reference_forward(m1, x1), "case1")

    # Case 2: non-causal, zero pad, strided downsampling conv +
    # time_group_norm; tile_t=128 forces 3 time tiles (cross-tile GN stats,
    # phase-split stride handling, aliased bf16 apply pass).
    cfg2 = dict(use_causal_conv=False, pad_mode="constant",
                norm_type="time_group_norm")
    m2 = EncodecConv1dPallas(k2, cfg2, in_channels=8, out_channels=16,
                             kernel_size=4, stride=2, dilation=1, tile_t=128)
    x2 = jax.random.normal(kx2, (2, 8, 520), jnp.float32)
    y2 = jax.jit(m2.__call__)(x2)
    jax.block_until_ready(y2)
    _check(y2, reference_forward(m2, x2), "case2")

    # Case 3: causal, reflect pad, dilated conv, weight_norm; tile_t=128
    # forces 2 time tiles so the halo block is actually read across tiles.
    cfg3 = dict(use_causal_conv=True, pad_mode="reflect", norm_type="weight_norm")
    m3 = EncodecConv1dPallas(k3, cfg3, in_channels=16, out_channels=32,
                             kernel_size=3, stride=1, dilation=3, tile_t=128)
    x3 = jax.random.normal(kx3, (2, 16, 200), jnp.float32)
    y3 = jax.jit(m3.__call__)(x3)
    jax.block_until_ready(y3)
    _check(y3, reference_forward(m3, x3), "case3")

    print("KERNEL_OK")
</pallas_src>

<mosaic_0001>
module attributes {stable_mosaic.version = 11 : i64} {
  func.func @kernel(%arg0: i32, %arg1: i32, %arg2: memref<1x4x128xbf16, #tpu.memory_space<vmem>>, %arg3: memref<1x4x128xbf16, #tpu.memory_space<vmem>>, %arg4: memref<7x8x4xbf16, #tpu.memory_space<vmem>>, %arg5: memref<8x1xf32, #tpu.memory_space<vmem>>, %arg6: memref<1x8x128xbf16, #tpu.memory_space<vmem>>) attributes {dimension_semantics = [#tpu.dimension_semantics<parallel>, #tpu.dimension_semantics<parallel>], iteration_bounds = array<i64: 2, 1>, scalar_prefetch = 0 : i64, scratch_operands = 0 : i64, tpu.core_type = #tpu.core_type<tc>, window_params = [{transform_indices = @transform_0, window_bounds = array<i64: 1, 4, 128>}, {transform_indices = @transform_1, window_bounds = array<i64: 1, 4, 128>}, {pipeline_mode = #tpu.pipeline_mode<synchronous>, transform_indices = @transform_2, window_bounds = array<i64: 7, 8, 4>}, {pipeline_mode = #tpu.pipeline_mode<synchronous>, transform_indices = @transform_3, window_bounds = array<i64: 8, 1>}, {transform_indices = @transform_4, window_bounds = array<i64: 1, 8, 128>}]} {
    %c0 = arith.constant 0 : index
    %c0_0 = arith.constant 0 : index
    %c0_1 = arith.constant 0 : index
    %0 = vector.load %arg2[%c0, %c0_0, %c0_1] : memref<1x4x128xbf16, #tpu.memory_space<vmem>>, vector<1x4x128xbf16>
    %1 = vector.shape_cast %0 : vector<1x4x128xbf16> to vector<4x128xbf16>
    %c0_2 = arith.constant 0 : index
    %c0_3 = arith.constant 0 : index
    %c0_4 = arith.constant 0 : index
    %2 = vector.load %arg4[%c0_2, %c0_3, %c0_4] : memref<7x8x4xbf16, #tpu.memory_space<vmem>>, vector<1x8x4xbf16>
    %3 = vector.shape_cast %2 : vector<1x8x4xbf16> to vector<8x4xbf16>
    %cst = arith.constant dense<0.000000e+00> : vector<8x128xf32>
    %4 = tpu.matmul %3, %1, %cst {dimension_numbers = #tpu.dot_dimension_numbers<[1], [0], [0], [1], [0, 0, 1, 1], [], []>} : vector<8x4xbf16>, vector<4x128xbf16>, vector<8x128xf32> -> vector<8x128xf32>
    %c0_5 = arith.constant 0 : index
    %c0_6 = arith.constant 0 : index
    %c1 = arith.constant 1 : index
    %5 = vector.load %arg2[%c0_5, %c0_6, %c1] : memref<1x4x128xbf16, #tpu.memory_space<vmem>>, vector<1x4x127xbf16>
    %6 = vector.shape_cast %5 : vector<1x4x127xbf16> to vector<4x127xbf16>
    %c0_7 = arith.constant 0 : index
    %c0_8 = arith.constant 0 : index
    %c0_9 = arith.constant 0 : index
    %7 = vector.load %arg3[%c0_7, %c0_8, %c0_9] : memref<1x4x128xbf16, #tpu.memory_space<vmem>>, vector<1x4x1xbf16>
    %8 = vector.shape_cast %7 : vector<1x4x1xbf16> to vector<4x1xbf16>
    %9 = tpu.concatenate %6, %8 in 1 : vector<4x127xbf16>, vector<4x1xbf16> -> vector<4x128xbf16>
    %c1_10 = arith.constant 1 : index
    %c0_11 = arith.constant 0 : index
    %c0_12 = arith.constant 0 : index
    %10 = vector.load %arg4[%c1_10, %c0_11, %c0_12] : memref<7x8x4xbf16, #tpu.memory_space<vmem>>, vector<1x8x4xbf16>
    %11 = vector.shape_cast %10 : vector<1x8x4xbf16> to vector<8x4xbf16>
    %cst_13 = arith.constant dense<0.000000e+00> : vector<8x128xf32>
    %12 = tpu.matmul %11, %9, %cst_13 {dimension_numbers = #tpu.dot_dimension_numbers<[1], [0], [0], [1], [0, 0, 1, 1], [], []>} : vector<8x4xbf16>, vector<4x128xbf16>, vector<8x128xf32> -> vector<8x128xf32>
    %13 = arith.addf %4, %12 : vector<8x128xf32>
    %c0_14 = arith.constant 0 : index
    %c0_15 = arith.constant 0 : index
    %c2 = arith.constant 2 : index
    %14 = vector.load %arg2[%c0_14, %c0_15, %c2] : memref<1x4x128xbf16, #tpu.memory_space<vmem>>, vector<1x4x126xbf16>
    %15 = vector.shape_cast %14 : vector<1x4x126xbf16> to vector<4x126xbf16>
    %c0_16 = arith.constant 0 : index
    %c0_17 = arith.constant 0 : index
    %c0_18 = arith.constant 0 : index
    %16 = vector.load %arg3[%c0_16, %c0_17, %c0_18] : memref<1x4x128xbf16, #tpu.memory_space<vmem>>, vector<1x4x2xbf16>
    %17 = vector.shape_cast %16 : vector<1x4x2xbf16> to vector<4x2xbf16>
    %18 = tpu.concatenate %15, %17 in 1 : vector<4x126xbf16>, vector<4x2xbf16> -> vector<4x128xbf16>
    %c2_19 = arith.constant 2 : index
    %c0_20 = arith.constant 0 : index
    %c0_21 = arith.constant 0 : index
    %19 = vector.load %arg4[%c2_19, %c0_20, %c0_21] : memref<7x8x4xbf16, #tpu.memory_space<vmem>>, vector<1x8x4xbf16>
    %20 = vector.shape_cast %19 : vector<1x8x4xbf16> to vector<8x4xbf16>
    %cst_22 = arith.constant dense<0.000000e+00> : vector<8x128xf32>
    %21 = tpu.matmul %20, %18, %cst_22 {dimension_numbers = #tpu.dot_dimension_numbers<[1], [0], [0], [1], [0, 0, 1, 1], [], []>} : vector<8x4xbf16>, vector<4x128xbf16>, vector<8x128xf32> -> vector<8x128xf32>
    %22 = arith.addf %13, %21 : vector<8x128xf32>
    %c0_23 = arith.constant 0 : index
    %c0_24 = arith.constant 0 : index
    %c3 = arith.constant 3 : index
    %23 = vector.load %arg2[%c0_23, %c0_24, %c3] : memref<1x4x128xbf16, #tpu.memory_space<vmem>>, vector<1x4x125xbf16>
    %24 = vector.shape_cast %23 : vector<1x4x125xbf16> to vector<4x125xbf16>
    %c0_25 = arith.constant 0 : index
    %c0_26 = arith.constant 0 : index
    %c0_27 = arith.constant 0 : index
    %25 = vector.load %arg3[%c0_25, %c0_26, %c0_27] : memref<1x4x128xbf16, #tpu.memory_space<vmem>>, vector<1x4x3xbf16>
    %26 = vector.shape_cast %25 : vector<1x4x3xbf16> to vector<4x3xbf16>
    %27 = tpu.concatenate %24, %26 in 1 : vector<4x125xbf16>, vector<4x3xbf16> -> vector<4x128xbf16>
    %c3_28 = arith.constant 3 : index
    %c0_29 = arith.constant 0 : index
    %c0_30 = arith.constant 0 : index
    %28 = vector.load %arg4[%c3_28, %c0_29, %c0_30] : memref<7x8x4xbf16, #tpu.memory_space<vmem>>, vector<1x8x4xbf16>
    %29 = vector.shape_cast %28 : vector<1x8x4xbf16> to vector<8x4xbf16>
    %cst_31 = arith.constant dense<0.000000e+00> : vector<8x128xf32>
    %30 = tpu.matmul %29, %27, %cst_31 {dimension_numbers = #tpu.dot_dimension_numbers<[1], [0], [0], [1], [0, 0, 1, 1], [], []>} : vector<8x4xbf16>, vector<4x128xbf16>, vector<8x128xf32> -> vector<8x128xf32>
    %31 = arith.addf %22, %30 : vector<8x128xf32>
    %c0_32 = arith.constant 0 : index
    %c0_33 = arith.constant 0 : index
    %c4 = arith.constant 4 : index
    %32 = vector.load %arg2[%c0_32, %c0_33, %c4] : memref<1x4x128xbf16, #tpu.memory_space<vmem>>, vector<1x4x124xbf16>
    %33 = vector.shape_cast %32 : vector<1x4x124xbf16> to vector<4x124xbf16>
    %c0_34 = arith.constant 0 : index
    %c0_35 = arith.constant 0 : index
    %c0_36 = arith.constant 0 : index
    %34 = vector.load %arg3[%c0_34, %c0_35, %c0_36] : memref<1x4x128xbf16, #tpu.memory_space<vmem>>, vector<1x4x4xbf16>
    %35 = vector.shape_cast %34 : vector<1x4x4xbf16> to vector<4x4xbf16>
    %36 = tpu.concatenate %33, %35 in 1 : vector<4x124xbf16>, vector<4x4xbf16> -> vector<4x128xbf16>
    %c4_37 = arith.constant 4 : index
    %c0_38 = arith.constant 0 : index
    %c0_39 = arith.constant 0 : index
    %37 = vector.load %arg4[%c4_37, %c0_38, %c0_39] : memref<7x8x4xbf16, #tpu.memory_space<vmem>>, vector<1x8x4xbf16>
    %38 = vector.shape_cast %37 : vector<1x8x4xbf16> to vector<8x4xbf16>
    %cst_40 = arith.constant dense<0.000000e+00> : vector<8x128xf32>
    %39 = tpu.matmul %38, %36, %cst_40 {dimension_numbers = #tpu.dot_dimension_numbers<[1], [0], [0], [1], [0, 0, 1, 1], [], []>} : vector<8x4xbf16>, vector<4x128xbf16>, vector<8x128xf32> -> vector<8x128xf32>
    %40 = arith.addf %31, %39 : vector<8x128xf32>
    %c0_41 = arith.constant 0 : index
    %c0_42 = arith.constant 0 : index
    %c5 = arith.constant 5 : index
    %41 = vector.load %arg2[%c0_41, %c0_42, %c5] : memref<1x4x128xbf16, #tpu.memory_space<vmem>>, vector<1x4x123xbf16>
    %42 = vector.shape_cast %41 : vector<1x4x123xbf16> to vector<4x123xbf16>
    %c0_43 = arith.constant 0 : index
    %c0_44 = arith.constant 0 : index
    %c0_45 = arith.constant 0 : index
    %43 = vector.load %arg3[%c0_43, %c0_44, %c0_45] : memref<1x4x128xbf16, #tpu.memory_space<vmem>>, vector<1x4x5xbf16>
    %44 = vector.shape_cast %43 : vector<1x4x5xbf16> to vector<4x5xbf16>
    %45 = tpu.concatenate %42, %44 in 1 : vector<4x123xbf16>, vector<4x5xbf16> -> vector<4x128xbf16>
    %c5_46 = arith.constant 5 : index
    %c0_47 = arith.constant 0 : index
    %c0_48 = arith.constant 0 : index
    %46 = vector.load %arg4[%c5_46, %c0_47, %c0_48] : memref<7x8x4xbf16, #tpu.memory_space<vmem>>, vector<1x8x4xbf16>
    %47 = vector.shape_cast %46 : vector<1x8x4xbf16> to vector<8x4xbf16>
    %cst_49 = arith.constant dense<0.000000e+00> : vector<8x128xf32>
    %48 = tpu.matmul %47, %45, %cst_49 {dimension_numbers = #tpu.dot_dimension_numbers<[1], [0], [0], [1], [0, 0, 1, 1], [], []>} : vector<8x4xbf16>, vector<4x128xbf16>, vector<8x128xf32> -> vector<8x128xf32>
    %49 = arith.addf %40, %48 : vector<8x128xf32>
    %c0_50 = arith.constant 0 : index
    %c0_51 = arith.constant 0 : index
    %c6 = arith.constant 6 : index
    %50 = vector.load %arg2[%c0_50, %c0_51, %c6] : memref<1x4x128xbf16, #tpu.memory_space<vmem>>, vector<1x4x122xbf16>
    %51 = vector.shape_cast %50 : vector<1x4x122xbf16> to vector<4x122xbf16>
    %c0_52 = arith.constant 0 : index
    %c0_53 = arith.constant 0 : index
    %c0_54 = arith.constant 0 : index
    %52 = vector.load %arg3[%c0_52, %c0_53, %c0_54] : memref<1x4x128xbf16, #tpu.memory_space<vmem>>, vector<1x4x6xbf16>
    %53 = vector.shape_cast %52 : vector<1x4x6xbf16> to vector<4x6xbf16>
    %54 = tpu.concatenate %51, %53 in 1 : vector<4x122xbf16>, vector<4x6xbf16> -> vector<4x128xbf16>
    %c6_55 = arith.constant 6 : index
    %c0_56 = arith.constant 0 : index
    %c0_57 = arith.constant 0 : index
    %55 = vector.load %arg4[%c6_55, %c0_56, %c0_57] : memref<7x8x4xbf16, #tpu.memory_space<vmem>>, vector<1x8x4xbf16>
    %56 = vector.shape_cast %55 : vector<1x8x4xbf16> to vector<8x4xbf16>
    %cst_58 = arith.constant dense<0.000000e+00> : vector<8x128xf32>
    %57 = tpu.matmul %56, %54, %cst_58 {dimension_numbers = #tpu.dot_dimension_numbers<[1], [0], [0], [1], [0, 0, 1, 1], [], []>} : vector<8x4xbf16>, vector<4x128xbf16>, vector<8x128xf32> -> vector<8x128xf32>
    %58 = arith.addf %49, %57 : vector<8x128xf32>
    %c0_59 = arith.constant 0 : index
    %c0_60 = arith.constant 0 : index
    %59 = vector.load %arg5[%c0_59, %c0_60] : memref<8x1xf32, #tpu.memory_space<vmem>>, vector<8x1xf32>
    %60 = vector.broadcast %59 : vector<8x1xf32> to vector<8x128xf32>
    %61 = arith.addf %58, %60 : vector<8x128xf32>
    %62 = arith.truncf %61 : vector<8x128xf32> to vector<8x128xbf16>
    %c0_61 = arith.constant 0 : index
    %c0_62 = arith.constant 0 : index
    %c0_63 = arith.constant 0 : index
    %63 = vector.load %arg6[%c0_61, %c0_62, %c0_63] : memref<1x8x128xbf16, #tpu.memory_space<vmem>>, vector<1x8x128xbf16>
    %64 = vector.shape_cast %63 : vector<1x8x128xbf16> to vector<8x128xbf16>
    %65 = vector.shape_cast %62 : vector<8x128xbf16> to vector<1x8x128xbf16>
    tpu.vector_store %arg6[%c0_61, %c0_62, %c0_63], %65 {strides = array<i32>} : memref<1x8x128xbf16, #tpu.memory_space<vmem>>, vector<1x8x128xbf16>,
    return
  }
  func.func @transform_0(%arg0: i32, %arg1: i32) -> (i32, i32, i32) {
    %c0_i32 = arith.constant 0 : i32
    %c0_i32_0 = arith.constant 0 : i32
    return %arg0, %c0_i32, %arg1 : i32, i32, i32
  }
  func.func @transform_1(%arg0: i32, %arg1: i32) -> (i32, i32, i32) {
    %c1_i32 = arith.constant 1 : i32
    %0 = arith.addi %arg1, %c1_i32 : i32
    %c1_i32_0 = arith.constant 1 : i32
    %1 = arith.muli %0, %c1_i32_0 : i32
    %c0_i32 = arith.constant 0 : i32
    %c0_i32_1 = arith.constant 0 : i32
    return %arg0, %c0_i32, %1 : i32, i32, i32
  }
  func.func @transform_2(%arg0: i32, %arg1: i32) -> (i32, i32, i32) {
    %c0_i32 = arith.constant 0 : i32
    %c0_i32_0 = arith.constant 0 : i32
    %c0_i32_1 = arith.constant 0 : i32
    %c0_i32_2 = arith.constant 0 : i32
    return %c0_i32, %c0_i32_0, %c0_i32_1 : i32, i32, i32
  }
  func.func @transform_3(%arg0: i32, %arg1: i32) -> (i32, i32) {
    %c0_i32 = arith.constant 0 : i32
    %c0_i32_0 = arith.constant 0 : i32
    %c0_i32_1 = arith.constant 0 : i32
    return %c0_i32, %c0_i32_0 : i32, i32
  }
  func.func @transform_4(%arg0: i32, %arg1: i32) -> (i32, i32, i32) {
    %c0_i32 = arith.constant 0 : i32
    %c0_i32_0 = arith.constant 0 : i32
    return %arg0, %c0_i32, %arg1 : i32, i32, i32
  }
}

</mosaic_0001>

<llo_original>
// kernel: a_call__.1
$region0: #{a_call__.1}
  #allocation0 [shape = 'u32[]', space=smem, size = 0x4, offset = 0x4, fixed_abs, tag = 'smem constant byte address 0x4 - core index']
  #allocation1 [shape = 'u32[144,128]{1,0:T(1,128)}', space=vmem, size = 0x12000, scoped, tag = 'internal scratch']
  %s0 = inlined_call_operand.vmem [shape: bf16[2,4,256], index: 0, kind: input, shape index: {}, may-alias: {0,1}]
  %s1 = inlined_call_operand.vmem [shape: bf16[2,4,256], index: 1, kind: input, shape index: {}, may-alias: {0,1}]
  %s2 = inlined_call_operand.vmem [shape: bf16[7,8,4], index: 2, kind: input, shape index: {}]
  %s3 = inlined_call_operand.vmem [shape: f32[8,1], index: 3, kind: input, shape index: {}]
  %s4 = inlined_call_operand.hbm [shape: bf16[2,8,128], index: 4, kind: output, shape index: {}]
  %s5 = sld [smem:[#allocation0]]
  $region49: #{a_call__.1} parent=0
    _
  %s7 = ssub.s32 1, %s5
  %s8 = scalar_select 0, %s7, %s5
  $region1: #{a_call__.1} parent=0
    #allocation2 [shape = 'u8[4096]{0}', space=vmem, size = 0x1000, scoped, tag = 'output window, operand 0']
    #allocation3 [shape = 's32[2]{0}', space=sflag, size = 0x8, scoped, tag = 'scoped memory for a_call__.1']
    %9 = vsyncpa [#allocation3], 0
    %s10 = scalar_lea.sflag [#allocation3], 1
    %11 = vsyncpa %s10, 0
    loop: start=0, step=1, limit=4
    $region2: #{a_call__.1} parent=1 // loop_pre_header
      _
    $region3: #{a_call__.1} parent=1 // loop_header
      %s13 = sphi 0, %s17
      %p14 = scmp.ge.s32.totalorder %s13, 4
      %s20 = sphi 0, %s32
      %s21 = sphi 0, %s28
      %s22 = sphi 0, %s20
      %s23 = sphi 0, %s21
      %s24 = sphi 0, %s22
      %s25 = sphi 0, %s23
      %s37 = sphi 0, %s39
      %s40 = sphi 0, %s37
      %s41 = sphi 0, %s40
      %s57 = sphi 0, %s41
      %s67 = sphi 0, %s69
      %s70 = sphi 0, %s67
      %s71 = sphi 0, %s70
      %s87 = sphi 0, %s71
      %s91 = sphi 0, %s91
      %s93 = sphi 0, %s91
      %s94 = sphi 0, %s93
      %s108 = sphi 0, %s94
      %s112 = sphi 0, %s112
      %s114 = sphi 0, %s112
      %s115 = sphi 0, %s114
      %s129 = sphi 0, %s115
      %s137 = sphi 0, %s139
      %s140 = sphi 0, %s137
      %s141 = sphi 0, %s140
      %s157 = sphi 0, %s141
    $region4: #{a_call__.1} parent=1 // loop_header_branch
      %16 = sbr.rel (%p14) target = $region8
    $region5: #{a_call__.1} parent=1 // loop_body
      %s18 = ssub.s32 %s13, 1
      %s19 = ssub.s32 %s13, 2
      %s26 = sadd.s32 1, %s21
      %p27 = scmp.ge.s32.totalorder %s26, 1
      %s28 = scalar_select %p27, 0, %s26
      %s29 = sadd.s32 1, %s20
      %s30 = scalar_select %p27, %s29, %s20
      %p31 = scmp.ge.s32.totalorder %s30, 2
      %s32 = scalar_select %p31, 0, %s30
      %s33 = ssub.s32 %s20, %s32
      %s34 = ssub.s32 %s21, %s28
      %s35 = sor.u32 %s33, %s34
      %p36 = scmp.eq.s32.totalorder %s35, 0
      %s38 = sadd.s32 %s37, 1
      %s39 = scalar_select %p36, %s37, %s38
      %p42 = pneg %p36
      %p43 = scmp.eq.s32.totalorder %s13, 1
      %p44 = por %p42, %p43
      %p45 = scmp.ne.s32.totalorder %s37, %s40
      %p46 = scmp.eq.s32.totalorder %s13, 0
      %p47 = por %p45, %p46
      %p48 = scmp.ne.s32.totalorder %s37, %s40
      %p49 = scmp.eq.s32.totalorder %s18, 1
      %p50 = por %p48, %p49
      %p51 = scmp.ne.s32.totalorder %s40, %s41
      %p52 = scmp.eq.s32.totalorder %s18, 0
      %p53 = por %p51, %p52
      %p54 = scmp.ne.s32.totalorder %s40, %s41
      %p55 = scmp.eq.s32.totalorder %s19, 1
      %p56 = por %p54, %p55
      %p58 = scmp.ne.s32.totalorder %s41, %s57
      %p59 = scmp.eq.s32.totalorder %s19, 0
      %p60 = por %p58, %p59
      %s61 = sadd.s32 %s21, 1
      %s62 = sadd.s32 %s28, 1
      %s63 = ssub.s32 %s20, %s32
      %s64 = ssub.s32 %s61, %s62
      %s65 = sor.u32 %s63, %s64
      %p66 = scmp.eq.s32.totalorder %s65, 0
      %s68 = sadd.s32 %s67, 1
      %s69 = scalar_select %p66, %s67, %s68
      %p72 = pneg %p66
      %p73 = scmp.eq.s32.totalorder %s13, 1
      %p74 = por %p72, %p73
      %p75 = scmp.ne.s32.totalorder %s67, %s70
      %p76 = scmp.eq.s32.totalorder %s13, 0
      %p77 = por %p75, %p76
      %p78 = scmp.ne.s32.totalorder %s67, %s70
      %p79 = scmp.eq.s32.totalorder %s18, 1
      %p80 = por %p78, %p79
      %p81 = scmp.ne.s32.totalorder %s70, %s71
      %p82 = scmp.eq.s32.totalorder %s18, 0
      %p83 = por %p81, %p82
      %p84 = scmp.ne.s32.totalorder %s70, %s71
      %p85 = scmp.eq.s32.totalorder %s19, 1
      %p86 = por %p84, %p85
      %p88 = scmp.ne.s32.totalorder %s71, %s87
      %p89 = scmp.eq.s32.totalorder %s19, 0
      %p90 = por %p88, %p89
      %s92 = sadd.s32 %s91, 1
      %p95 = scmp.eq.s32.totalorder %s13, 1
      %p96 = scmp.ne.s32.totalorder %s91, %s93
      %p97 = scmp.eq.s32.totalorder %s13, 0
      %p98 = por %p96, %p97
      %p99 = scmp.ne.s32.totalorder %s91, %s93
      %p100 = scmp.eq.s32.totalorder %s18, 1
      %p101 = por %p99, %p100
      %p102 = scmp.ne.s32.totalorder %s93, %s94
      %p103 = scmp.eq.s32.totalorder %s18, 0
      %p104 = por %p102, %p103
      %p105 = scmp.ne.s32.totalorder %s93, %s94
      %p106 = scmp.eq.s32.totalorder %s19, 1
      %p107 = por %p105, %p106
      %p109 = scmp.ne.s32.totalorder %s94, %s108
      %p110 = scmp.eq.s32.totalorder %s19, 0
      %p111 = por %p109, %p110
      %s113 = sadd.s32 %s112, 1
      %p116 = scmp.eq.s32.totalorder %s13, 1
      %p117 = scmp.ne.s32.totalorder %s112, %s114
      %p118 = scmp.eq.s32.totalorder %s13, 0
      %p119 = por %p117, %p118
      %p120 = scmp.ne.s32.totalorder %s112, %s114
      %p121 = scmp.eq.s32.totalorder %s18, 1
      %p122 = por %p120, %p121
      %p123 = scmp.ne.s32.totalorder %s114, %s115
      %p124 = scmp.eq.s32.totalorder %s18, 0
      %p125 = por %p123, %p124
      %p126 = scmp.ne.s32.totalorder %s114, %s115
      %p127 = scmp.eq.s32.totalorder %s19, 1
      %p128 = por %p126, %p127
      %p130 = scmp.ne.s32.totalorder %s115, %s129
      %p131 = scmp.eq.s32.totalorder %s19, 0
      %p132 = por %p130, %p131
      %s133 = ssub.s32 %s20, %s32
      %s134 = ssub.s32 %s21, %s28
      %s135 = sor.u32 %s133, %s134
      %p136 = scmp.eq.s32.totalorder %s135, 0
      %s138 = sadd.s32 %s137, 1
      %s139 = scalar_select %p136, %s137, %s138
      %p142 = pneg %p136
      %p143 = scmp.eq.s32.totalorder %s13, 1
      %p144 = por %p142, %p143
      %p145 = scmp.ne.s32.totalorder %s137, %s140
      %p146 = scmp.eq.s32.totalorder %s13, 0
      %p147 = por %p145, %p146
      %p148 = scmp.ne.s32.totalorder %s137, %s140
      %p149 = scmp.eq.s32.totalorder %s18, 1
      %p150 = por %p148, %p149
      %p151 = scmp.ne.s32.totalorder %s140, %s141
      %p152 = scmp.eq.s32.totalorder %s18, 0
      %p153 = por %p151, %p152
      %p154 = scmp.ne.s32.totalorder %s140, %s141
      %p155 = scmp.eq.s32.totalorder %s19, 1
      %p156 = por %p154, %p155
      %p158 = scmp.ne.s32.totalorder %s141, %s157
      %p159 = scmp.eq.s32.totalorder %s19, 0
      %p160 = por %p158, %p159
      %p161 = scmp.le.s32.totalorder 1, %s13
      %p162 = scmp.lt.s32.totalorder %s13, 3
      %p163 = pnand %p161, %p162
      %p164 = pneg %p163
      // Predicated region
      $region9: #{a_call__.1} parent=5 // pred_check
        _
      $region10: #{a_call__.1} parent=5 // pred_check_branch
        %166 = sbr.rel (%p163) target = $region12
      $region11: #{a_call__.1} parent=5 // pred_region
        %s167 = ssub.s32 %s13, 1
        // Predicated region
        $region13: #{a_call__.1} parent=11 // pred_check
          %p168 = pneg %p104
        $region14: #{a_call__.1} parent=11 // pred_check_branch
          %170 = sbr.rel (%p168) target = $region16
        $region15: #{a_call__.1} parent=11 // pred_region
          _
        $region16: #{a_call__.1} parent=11 // pred_fallthru
          _
        // Predicated region
        $region17: #{a_call__.1} parent=11 // pred_check
          %p171 = pneg %p125
        $region18: #{a_call__.1} parent=11 // pred_check_branch
          %173 = sbr.rel (%p171) target = $region20
        $region19: #{a_call__.1} parent=11 // pred_region
          _
        $region20: #{a_call__.1} parent=11 // pred_fallthru
          _
      $region12: #{a_call__.1} parent=5 // pred_fallthru
        _
      %p174 = scmp.lt.s32.totalorder %s13, 2
      // Predicated region
      $region21: #{a_call__.1} parent=5 // pred_check
        %p175 = pneg %p174
      $region22: #{a_call__.1} parent=5 // pred_check_branch
        %177 = sbr.rel (%p175) target = $region24
      $region23: #{a_call__.1} parent=5 // pred_region
        // Predicated region
        $region25: #{a_call__.1} parent=23 // pred_check
          %p178 = pneg %p47
        $region26: #{a_call__.1} parent=23 // pred_check_branch
          %180 = sbr.rel (%p178) target = $region28
        $region27: #{a_call__.1} parent=23 // pred_region
          %p181 = scmp.lt.s32.totalorder %s20, 1
          %s182 = scalar_select %p181, %s20, 1
          %p183 = scmp.lt.s32.totalorder %s21, 1
          %s184 = scalar_select %p183, %s21, 1
          %s185 = smul.addr %s182, 2
          %s186 = sadd.s32 %s184, %s185
          %s187 = smul.addr %s186, 2
          %s188 = scalar_lea.vmem %s0, %s187
        $region28: #{a_call__.1} parent=23 // pred_fallthru
          _
        // Predicated region
        $region29: #{a_call__.1} parent=23 // pred_check
          %p189 = pneg %p77
        $region30: #{a_call__.1} parent=23 // pred_check_branch
          %191 = sbr.rel (%p189) target = $region32
        $region31: #{a_call__.1} parent=23 // pred_region
          %s192 = sadd.s32 %s21, 1
          %p193 = scmp.lt.s32.totalorder %s20, 1
          %s194 = scalar_select %p193, %s20, 1
          %p195 = scmp.lt.s32.totalorder %s192, 1
          %s196 = scalar_select %p195, %s192, 1
          %s197 = smul.addr %s194, 2
          %s198 = sadd.s32 %s196, %s197
          %s199 = smul.addr %s198, 2
          %s200 = scalar_lea.vmem %s1, %s199
          %s201 = sadd.s32 %s21, 1
        $region32: #{a_call__.1} parent=23 // pred_fallthru
          _
      $region24: #{a_call__.1} parent=5 // pred_fallthru
        _
      %p202 = scmp.le.s32.totalorder 1, %s13
      %p203 = scmp.lt.s32.totalorder %s13, 3
      %p204 = pnand %p202, %p203
      %p205 = pneg %p204
      // Predicated region
      $region33: #{a_call__.1} parent=5 // pred_check
        _
      $region34: #{a_call__.1} parent=5 // pred_check_branch
        %207 = sbr.rel (%p204) target = $region36
      $region35: #{a_call__.1} parent=5 // pred_region
        %s208 = ssub.s32 %s13, 1
        %p209 = scmp.lt.s32.totalorder %s22, 1
        %s210 = scalar_select %p209, %s22, 1
        %p211 = scmp.lt.s32.totalorder %s23, 1
        %s212 = scalar_select %p211, %s23, 1
        %s213 = smul.addr %s210, 2
        %s214 = sadd.s32 %s212, %s213
        %s215 = smul.addr %s214, 2
        %s216 = scalar_lea.vmem %s0, %s215
        %p217 = pneg %p53
        %p218 = pneg %p50
        %s219 = sadd.s32 %s23, 1
        %p220 = scmp.lt.s32.totalorder %s22, 1
        %s221 = scalar_select %p220, %s22, 1
        %p222 = scmp.lt.s32.totalorder %s219, 1
        %s223 = scalar_select %p222, %s219, 1
        %s224 = smul.addr %s221, 2
        %s225 = sadd.s32 %s223, %s224
        %s226 = smul.addr %s225, 2
        %s227 = scalar_lea.vmem %s1, %s226
        %p228 = pneg %p83
        %p229 = pneg %p80
        %p230 = pneg %p104
        %p231 = pneg %p101
        %p232 = pneg %p125
        %p233 = pneg %p122
        %p234 = pneg %p153
        %p235 = pneg %p150
        %s236 = sand.u32 %s140, 1
        %s237 = scalar_lea.sflag [#allocation3], %s236
        %s238 = sand.u32 %s140, 1
        %s239 = smul.addr %s238, 4
        %s240 = scalar_lea.vmem [#allocation2], %s239
        %p241 = scmp.lt.s32.totalorder %s22, 1
        %s242 = scalar_select %p241, %s22, 1
        %p243 = scmp.lt.s32.totalorder %s23, 1
        %s244 = scalar_select %p243, %s23, 1
        %s245 = smul.addr %s242, 2
        %s246 = sadd.s32 %s244, %s245
        %s247 = smul.addr %s246, 2
        %s248 = scalar_lea.vmem %s0, %s247
        %s249 = sadd.s32 %s23, 1
        %p250 = scmp.lt.s32.totalorder %s22, 1
        %s251 = scalar_select %p250, %s22, 1
        %p252 = scmp.lt.s32.totalorder %s249, 1
        %s253 = scalar_select %p252, %s249, 1
        %s254 = smul.addr %s251, 2
        %s255 = sadd.s32 %s253, %s254
        %s256 = smul.addr %s255, 2
        %s257 = scalar_lea.vmem %s1, %s256
        %s258 = sadd.s32 %s23, 1
        %v260 = vld [vmem:[%s248] sm:$0x3]
        %v261 = vld [vmem:[%s2] sm:$0xf]
        %v262 = vld [vmem:[%s257] sm:$0x3]
        %v265 = vunpack.c.l.s4 1983009808
        %v266 = vunpack.c.0.s8 %v265
        %v267 = vlaneseq
        %v268 = vshrl.u32 %v267, 7
        %v269 = vsub.s32 %v266, %v268
        %v270 = vrot.slane %v260, %v269
        %271 = vrot.lane.b32.xlu0 %v270, 127
        %v272 = vpop.permute.xlu0 %271
        %v275 = vunpack.c.l.s4 1983009808
        %v276 = vunpack.c.0.s8 %v275
        %v277 = vlaneseq
        %v278 = vshrl.u32 %v277, 7
        %v279 = vsub.s32 %v276, %v278
        %v280 = vrot.slane %v262, %v279
        %281 = vrot.lane.b32.xlu0 %v280, 127
        %v282 = vpop.permute.xlu0 %281
        %vm283 = vcmask 1039360
        %v286 = vsel %vm283, %v272, %v282
        %s287 = scalar_lea.vmem %s2, 4
        %v288 = vld [vmem:[%s287] sm:$0xf]
        %vm289 = vcmask 31744
        %v291 = vsel %vm289, %v288, 0
        %vm293 = vcmask 1041408
        %v294 = vsel %vm293, %v286, 0
        %296 = vmatprep.subr.bf16.mxu0 0
        %297 = vmatpush1.bf16.msra.mxu0 %v294
        %298 = vmatprep.subr.bf16.mxu0 0
        %299 = vmatpush1.bf16.msra.mxu0 0
        %300 = vmatprep.subr.bf16.mxu0 0
        %301 = vmatpush1.bf16.msra.mxu0 0
        %302 = vmatprep.subr.bf16.mxu0 0
        %303 = vmatpush1.bf16.msra.mxu0 0
        %304 = vmatprep.subr.bf16.mxu0 0
        %305 = vmatpush1.bf16.msra.mxu0 0
        %306 = vmatprep.subr.bf16.mxu0 0
        %307 = vmatpush1.bf16.msra.mxu0 0
        %308 = vmatprep.subr.bf16.mxu0 0
        %309 = vmatpush1.bf16.msra.mxu0 0
        %310 = vmatprep.subr.bf16.mxu0 0
        %311 = vmatpush1.bf16.msra.mxu0 0
        %312 = vmatprep.subr.bf16.mxu0 0
        %313 = vmatpush1.bf16.msra.mxu0 0
        %314 = vmatprep.subr.bf16.mxu0 0
        %315 = vmatpush1.bf16.msra.mxu0 0
        %316 = vmatprep.subr.bf16.mxu0 0
        %317 = vmatpush1.bf16.msra.mxu0 0
        %318 = vmatprep.subr.bf16.mxu0 0
        %319 = vmatpush1.bf16.msra.mxu0 0
        %320 = vmatprep.subr.bf16.mxu0 0
        %321 = vmatpush1.bf16.msra.mxu0 0
        %322 = vmatprep.subr.bf16.mxu0 0
        %323 = vmatpush1.bf16.msra.mxu0 0
        %324 = vmatprep.subr.bf16.mxu0 0
        %325 = vmatpush1.bf16.msra.mxu0 0
        %326 = vmatprep.subr.bf16.mxu0 0
        %327 = vmatpush1.bf16.msra.mxu0 0
        %328 = vmatprep.mubr.bf16.mxu0 0
        %329 = vmatmul.mubr.bf16.gmra.mrb[0].mxu0 %v291
        %v330 = vpop.f32.mrb[0].mxu0
        %v331 = vadd.f32 0.0, %v330
        %v332 = vpop.f32.mrb[0].mxu0
        %v333 = vpop.f32.mrb[0].mxu0
        %v334 = vpop.f32.mrb[0].mxu0
        %335 = vdwg.mxu0
        %v337 = vsel %vm289, %v261, 0
        %v340 = vsel %vm293, %v260, 0
        %342 = vmatprep.subr.bf16.mxu0 0
        %343 = vmatpush1.bf16.msra.mxu0 %v340
        %344 = vmatprep.subr.bf16.mxu0 0
        %345 = vmatpush1.bf16.msra.mxu0 0
        %346 = vmatprep.subr.bf16.mxu0 0
        %347 = vmatpush1.bf16.msra.mxu0 0
        %348 = vmatprep.subr.bf16.mxu0 0
        %349 = vmatpush1.bf16.msra.mxu0 0
        %350 = vmatprep.subr.bf16.mxu0 0
        %351 = vmatpush1.bf16.msra.mxu0 0
        %352 = vmatprep.subr.bf16.mxu0 0
        %353 = vmatpush1.bf16.msra.mxu0 0
        %354 = vmatprep.subr.bf16.mxu0 0
        %355 = vmatpush1.bf16.msra.mxu0 0
        %356 = vmatprep.subr.bf16.mxu0 0
        %357 = vmatpush1.bf16.msra.mxu0 0
        %358 = vmatprep.subr.bf16.mxu0 0
        %359 = vmatpush1.bf16.msra.mxu0 0
        %360 = vmatprep.subr.bf16.mxu0 0
        %361 = vmatpush1.bf16.msra.mxu0 0
        %362 = vmatprep.subr.bf16.mxu0 0
        %363 = vmatpush1.bf16.msra.mxu0 0
        %364 = vmatprep.subr.bf16.mxu0 0
        %365 = vmatpush1.bf16.msra.mxu0 0
        %366 = vmatprep.subr.bf16.mxu0 0
        %367 = vmatpush1.bf16.msra.mxu0 0
        %368 = vmatprep.subr.bf16.mxu0 0
        %369 = vmatpush1.bf16.msra.mxu0 0
        %370 = vmatprep.subr.bf16.mxu0 0
        %371 = vmatpush1.bf16.msra.mxu0 0
        %372 = vmatprep.subr.bf16.mxu0 0
        %373 = vmatpush1.bf16.msra.mxu0 0
        %374 = vmatprep.mubr.bf16.mxu0 0
        %375 = vmatmul.mubr.bf16.gmra.mrb[0].mxu0 %v337
        %v376 = vpop.f32.mrb[0].mxu0
        %v377 = vadd.f32 %v331, %v376
        %v378 = vpop.f32.mrb[0].mxu0
        %v379 = vpop.f32.mrb[0].mxu0
        %v380 = vpop.f32.mrb[0].mxu0
        %381 = vdwg.mxu0
        %v382 = vld [vmem:[%s248] sm:$0x3]
        %v383 = vld [vmem:[%s257] sm:$0x3]
        %v386 = vunpack.c.l.s4 1983009808
        %v387 = vunpack.c.0.s8 %v386
        %v388 = vlaneseq
        %v389 = vshrl.u32 %v388, 7
        %v390 = vsub.s32 %v387, %v389
        %v391 = vrot.slane %v382, %v390
        %392 = vrot.lane.b32.xlu0 %v391, 126
        %v393 = vpop.permute.xlu0 %392
        %v396 = vunpack.c.l.s4 1983009808
        %v397 = vunpack.c.0.s8 %v396
        %v398 = vlaneseq
        %v399 = vshrl.u32 %v398, 7
        %v400 = vsub.s32 %v397, %v399
        %v401 = vrot.slane %v383, %v400
        %402 = vrot.lane.b32.xlu0 %v401, 126
        %v403 = vpop.permute.xlu0 %402
        %vm404 = vcmask 1031168
        %v407 = vsel %vm404, %v393, %v403
        %s408 = scalar_lea.vmem %s2, 8
        %v409 = vld [vmem:[%s408] sm:$0xf]
        %v411 = vsel %vm289, %v409, 0
        %v413 = vsel %vm293, %v407, 0
        %415 = vmatprep.subr.bf16.mxu0 0
        %416 = vmatpush1.bf16.msra.mxu0 %v413
        %417 = vmatprep.subr.bf16.mxu0 0
        %418 = vmatpush1.bf16.msra.mxu0 0
        %419 = vmatprep.subr.bf16.mxu0 0
        %420 = vmatpush1.bf16.msra.mxu0 0
        %421 = vmatprep.subr.bf16.mxu0 0
        %422 = vmatpush1.bf16.msra.mxu0 0
        %423 = vmatprep.subr.bf16.mxu0 0
        %424 = vmatpush1.bf16.msra.mxu0 0
        %425 = vmatprep.subr.bf16.mxu0 0
        %426 = vmatpush1.bf16.msra.mxu0 0
        %427 = vmatprep.subr.bf16.mxu0 0
        %428 = vmatpush1.bf16.msra.mxu0 0
        %429 = vmatprep.subr.bf16.mxu0 0
        %430 = vmatpush1.bf16.msra.mxu0 0
        %431 = vmatprep.subr.bf16.mxu0 0
        %432 = vmatpush1.bf16.msra.mxu0 0
        %433 = vmatprep.subr.bf16.mxu0 0
        %434 = vmatpush1.bf16.msra.mxu0 0
        %435 = vmatprep.subr.bf16.mxu0 0
        %436 = vmatpush1.bf16.msra.mxu0 0
        %437 = vmatprep.subr.bf16.mxu0 0
        %438 = vmatpush1.bf16.msra.mxu0 0
        %439 = vmatprep.subr.bf16.mxu0 0
        %440 = vmatpush1.bf16.msra.mxu0 0
        %441 = vmatprep.subr.bf16.mxu0 0
        %442 = vmatpush1.bf16.msra.mxu0 0
        %443 = vmatprep.subr.bf16.mxu0 0
        %444 = vmatpush1.bf16.msra.mxu0 0
        %445 = vmatprep.subr.bf16.mxu0 0
        %446 = vmatpush1.bf16.msra.mxu0 0
        %447 = vmatprep.mubr.bf16.mxu0 0
        %448 = vmatmul.mubr.bf16.gmra.mrb[0].mxu0 %v411
        %v449 = vpop.f32.mrb[0].mxu0
        %v450 = vadd.f32 0.0, %v449
        %v451 = vpop.f32.mrb[0].mxu0
        %v452 = vpop.f32.mrb[0].mxu0
        %v453 = vpop.f32.mrb[0].mxu0
        %454 = vdwg.mxu0
        %v455 = vadd.f32 %v377, %v450
        %v456 = vld [vmem:[%s248] sm:$0x3]
        %v457 = vld [vmem:[%s257] sm:$0x3]
        %v460 = vunpack.c.l.s4 1983009808
        %v461 = vunpack.c.0.s8 %v460
        %v462 = vlaneseq
        %v463 = vshrl.u32 %v462, 7
        %v464 = vsub.s32 %v461, %v463
        %v465 = vrot.slane %v456, %v464
        %466 = vrot.lane.b32.xlu0 %v465, 125
        %v467 = vpop.permute.xlu0 %466
        %v470 = vunpack.c.l.s4 1983009808
        %v471 = vunpack.c.0.s8 %v470
        %v472 = vlaneseq
        %v473 = vshrl.u32 %v472, 7
        %v474 = vsub.s32 %v471, %v473
        %v475 = vrot.slane %v457, %v474
        %476 = vrot.lane.b32.xlu0 %v475, 125
        %v477 = vpop.permute.xlu0 %476
        %vm478 = vcmask 1022976
        %v481 = vsel %vm478, %v467, %v477
        %s482 = scalar_lea.vmem %s2, 12
        %v483 = vld [vmem:[%s482] sm:$0xf]
        %v485 = vsel %vm289, %v483, 0
        %v487 = vsel %vm293, %v481, 0
        %489 = vmatprep.subr.bf16.mxu0 0
        %490 = vmatpush1.bf16.msra.mxu0 %v487
        %491 = vmatprep.subr.bf16.mxu0 0
        %492 = vmatpush1.bf16.msra.mxu0 0
        %493 = vmatprep.subr.bf16.mxu0 0
        %494 = vmatpush1.bf16.msra.mxu0 0
        %495 = vmatprep.subr.bf16.mxu0 0
        %496 = vmatpush1.bf16.msra.mxu0 0
        %497 = vmatprep.subr.bf16.mxu0 0
        %498 = vmatpush1.bf16.msra.mxu0 0
        %499 = vmatprep.subr.bf16.mxu0 0
        %500 = vmatpush1.bf16.msra.mxu0 0
        %501 = vmatprep.subr.bf16.mxu0 0
        %502 = vmatpush1.bf16.msra.mxu0 0
        %503 = vmatprep.subr.bf16.mxu0 0
        %504 = vmatpush1.bf16.msra.mxu0 0
        %505 = vmatprep.subr.bf16.mxu0 0
        %506 = vmatpush1.bf16.msra.mxu0 0
        %507 = vmatprep.subr.bf16.mxu0 0
        %508 = vmatpush1.bf16.msra.mxu0 0
        %509 = vmatprep.subr.bf16.mxu0 0
        %510 = vmatpush1.bf16.msra.mxu0 0
        %511 = vmatprep.subr.bf16.mxu0 0
        %512 = vmatpush1.bf16.msra.mxu0 0
        %513 = vmatprep.subr.bf16.mxu0 0
        %514 = vmatpush1.bf16.msra.mxu0 0
        %515 = vmatprep.subr.bf16.mxu0 0
        %516 = vmatpush1.bf16.msra.mxu0 0
        %517 = vmatprep.subr.bf16.mxu0 0
        %518 = vmatpush1.bf16.msra.mxu0 0
        %519 = vmatprep.subr.bf16.mxu0 0
        %520 = vmatpush1.bf16.msra.mxu0 0
        %521 = vmatprep.mubr.bf16.mxu0 0
        %522 = vmatmul.mubr.bf16.gmra.mrb[0].mxu0 %v485
        %v523 = vpop.f32.mrb[0].mxu0
        %v524 = vadd.f32 0.0, %v523
        %v525 = vpop.f32.mrb[0].mxu0
        %v526 = vpop.f32.mrb[0].mxu0
        %v527 = vpop.f32.mrb[0].mxu0
        %528 = vdwg.mxu0
        %v529 = vadd.f32 %v455, %v524
        %v530 = vld [vmem:[%s248] sm:$0x3]
        %v531 = vld [vmem:[%s257] sm:$0x3]
        %v534 = vunpack.c.l.s4 1983009808
        %v535 = vunpack.c.0.s8 %v534
        %v536 = vlaneseq
        %v537 = vshrl.u32 %v536, 7
        %v538 = vsub.s32 %v535, %v537
        %v539 = vrot.slane %v530, %v538
        %540 = vrot.lane.b32.xlu0 %v539, 124
        %v541 = vpop.permute.xlu0 %540
        %v544 = vunpack.c.l.s4 1983009808
        %v545 = vunpack.c.0.s8 %v544
        %v546 = vlaneseq
        %v547 = vshrl.u32 %v546, 7
        %v548 = vsub.s32 %v545, %v547
        %v549 = vrot.slane %v531, %v548
        %550 = vrot.lane.b32.xlu0 %v549, 124
        %v551 = vpop.permute.xlu0 %550
        %vm552 = vcmask 1014784
        %v555 = vsel %vm552, %v541, %v551
        %s556 = scalar_lea.vmem %s2, 16
        %v557 = vld [vmem:[%s556] sm:$0xf]
        %v559 = vsel %vm289, %v557, 0
        %v561 = vsel %vm293, %v555, 0
        %563 = vmatprep.subr.bf16.mxu0 0
        %564 = vmatpush1.bf16.msra.mxu0 %v561
        %565 = vmatprep.subr.bf16.mxu0 0
        %566 = vmatpush1.bf16.msra.mxu0 0
        %567 = vmatprep.subr.bf16.mxu0 0
        %568 = vmatpush1.bf16.msra.mxu0 0
        %569 = vmatprep.subr.bf16.mxu0 0
        %570 = vmatpush1.bf16.msra.mxu0 0
        %571 = vmatprep.subr.bf16.mxu0 0
        %572 = vmatpush1.bf16.msra.mxu0 0
        %573 = vmatprep.subr.bf16.mxu0 0
        %574 = vmatpush1.bf16.msra.mxu0 0
        %575 = vmatprep.subr.bf16.mxu0 0
        %576 = vmatpush1.bf16.msra.mxu0 0
        %577 = vmatprep.subr.bf16.mxu0 0
        %578 = vmatpush1.bf16.msra.mxu0 0
        %579 = vmatprep.subr.bf16.mxu0 0
        %580 = vmatpush1.bf16.msra.mxu0 0
        %581 = vmatprep.subr.bf16.mxu0 0
        %582 = vmatpush1.bf16.msra.mxu0 0
        %583 = vmatprep.subr.bf16.mxu0 0
        %584 = vmatpush1.bf16.msra.mxu0 0
        %585 = vmatprep.subr.bf16.mxu0 0
        %586 = vmatpush1.bf16.msra.mxu0 0
        %587 = vmatprep.subr.bf16.mxu0 0
        %588 = vmatpush1.bf16.msra.mxu0 0
        %589 = vmatprep.subr.bf16.mxu0 0
        %590 = vmatpush1.bf16.msra.mxu0 0
        %591 = vmatprep.subr.bf16.mxu0 0
        %592 = vmatpush1.bf16.msra.mxu0 0
        %593 = vmatprep.subr.bf16.mxu0 0
        %594 = vmatpush1.bf16.msra.mxu0 0
        %595 = vmatprep.mubr.bf16.mxu0 0
        %596 = vmatmul.mubr.bf16.gmra.mrb[0].mxu0 %v559
        %v597 = vpop.f32.mrb[0].mxu0
        %v598 = vadd.f32 0.0, %v597
        %v599 = vpop.f32.mrb[0].mxu0
        %v600 = vpop.f32.mrb[0].mxu0
        %v601 = vpop.f32.mrb[0].mxu0
        %602 = vdwg.mxu0
        %v603 = vadd.f32 %v529, %v598
        %v604 = vld [vmem:[%s248] sm:$0x3]
        %v605 = vld [vmem:[%s257] sm:$0x3]
        %v608 = vunpack.c.l.s4 1983009808
        %v609 = vunpack.c.0.s8 %v608
        %v610 = vlaneseq
        %v611 = vshrl.u32 %v610, 7
        %v612 = vsub.s32 %v609, %v611
        %v613 = vrot.slane %v604, %v612
        %614 = vrot.lane.b32.xlu0 %v613, 123
        %v615 = vpop.permute.xlu0 %614
        %v618 = vunpack.c.l.s4 1983009808
        %v619 = vunpack.c.0.s8 %v618
        %v620 = vlaneseq
        %v621 = vshrl.u32 %v620, 7
        %v622 = vsub.s32 %v619, %v621
        %v623 = vrot.slane %v605, %v622
        %624 = vrot.lane.b32.xlu0 %v623, 123
        %v625 = vpop.permute.xlu0 %624
        %vm626 = vcmask 1006592
        %v629 = vsel %vm626, %v615, %v625
        %s630 = scalar_lea.vmem %s2, 20
        %v631 = vld [vmem:[%s630] sm:$0xf]
        %v633 = vsel %vm289, %v631, 0
        %v635 = vsel %vm293, %v629, 0
        %637 = vmatprep.subr.bf16.mxu0 0
        %638 = vmatpush1.bf16.msra.mxu0 %v635
        %639 = vmatprep.subr.bf16.mxu0 0
        %640 = vmatpush1.bf16.msra.mxu0 0
        %641 = vmatprep.subr.bf16.mxu0 0
        %642 = vmatpush1.bf16.msra.mxu0 0
        %643 = vmatprep.subr.bf16.mxu0 0
        %644 = vmatpush1.bf16.msra.mxu0 0
        %645 = vmatprep.subr.bf16.mxu0 0
        %646 = vmatpush1.bf16.msra.mxu0 0
        %647 = vmatprep.subr.bf16.mxu0 0
        %648 = vmatpush1.bf16.msra.mxu0 0
        %649 = vmatprep.subr.bf16.mxu0 0
        %650 = vmatpush1.bf16.msra.mxu0 0
        %651 = vmatprep.subr.bf16.mxu0 0
        %652 = vmatpush1.bf16.msra.mxu0 0
        %653 = vmatprep.subr.bf16.mxu0 0
        %654 = vmatpush1.bf16.msra.mxu0 0
        %655 = vmatprep.subr.bf16.mxu0 0
        %656 = vmatpush1.bf16.msra.mxu0 0
        %657 = vmatprep.subr.bf16.mxu0 0
        %658 = vmatpush1.bf16.msra.mxu0 0
        %659 = vmatprep.subr.bf16.mxu0 0
        %660 = vmatpush1.bf16.msra.mxu0 0
        %661 = vmatprep.subr.bf16.mxu0 0
        %662 = vmatpush1.bf16.msra.mxu0 0
        %663 = vmatprep.subr.bf16.mxu0 0
        %664 = vmatpush1.bf16.msra.mxu0 0
        %665 = vmatprep.subr.bf16.mxu0 0
        %666 = vmatpush1.bf16.msra.mxu0 0
        %667 = vmatprep.subr.bf16.mxu0 0
        %668 = vmatpush1.bf16.msra.mxu0 0
        %669 = vmatprep.mubr.bf16.mxu0 0
        %670 = vmatmul.mubr.bf16.gmra.mrb[0].mxu0 %v633
        %v671 = vpop.f32.mrb[0].mxu0
        %v672 = vadd.f32 0.0, %v671
        %v673 = vpop.f32.mrb[0].mxu0
        %v674 = vpop.f32.mrb[0].mxu0
        %v675 = vpop.f32.mrb[0].mxu0
        %676 = vdwg.mxu0
        %v677 = vadd.f32 %v603, %v672
        %v678 = vld [vmem:[%s248] sm:$0x3]
        %v679 = vld [vmem:[%s257] sm:$0x3]
        %v682 = vunpack.c.l.s4 1983009808
        %v683 = vunpack.c.0.s8 %v682
        %v684 = vlaneseq
        %v685 = vshrl.u32 %v684, 7
        %v686 = vsub.s32 %v683, %v685
        %v687 = vrot.slane %v678, %v686
        %688 = vrot.lane.b32.xlu0 %v687, 122
        %v689 = vpop.permute.xlu0 %688
        %v692 = vunpack.c.l.s4 1983009808
        %v693 = vunpack.c.0.s8 %v692
        %v694 = vlaneseq
        %v695 = vshrl.u32 %v694, 7
        %v696 = vsub.s32 %v693, %v695
        %v697 = vrot.slane %v679, %v696
        %698 = vrot.lane.b32.xlu0 %v697, 122
        %v699 = vpop.permute.xlu0 %698
        %vm700 = vcmask 998400
        %v703 = vsel %vm700, %v689, %v699
        %s704 = scalar_lea.vmem %s2, 24
        %v705 = vld [vmem:[%s704] sm:$0xf]
        %v707 = vsel %vm289, %v705, 0
        %v709 = vsel %vm293, %v703, 0
        %711 = vmatprep.subr.bf16.mxu0 0
        %712 = vmatpush1.bf16.msra.mxu0 %v709
        %713 = vmatprep.subr.bf16.mxu0 0
        %714 = vmatpush1.bf16.msra.mxu0 0
        %715 = vmatprep.subr.bf16.mxu0 0
        %716 = vmatpush1.bf16.msra.mxu0 0
        %717 = vmatprep.subr.bf16.mxu0 0
        %718 = vmatpush1.bf16.msra.mxu0 0
        %719 = vmatprep.subr.bf16.mxu0 0
        %720 = vmatpush1.bf16.msra.mxu0 0
        %721 = vmatprep.subr.bf16.mxu0 0
        %722 = vmatpush1.bf16.msra.mxu0 0
        %723 = vmatprep.subr.bf16.mxu0 0
        %724 = vmatpush1.bf16.msra.mxu0 0
        %725 = vmatprep.subr.bf16.mxu0 0
        %726 = vmatpush1.bf16.msra.mxu0 0
        %727 = vmatprep.subr.bf16.mxu0 0
        %728 = vmatpush1.bf16.msra.mxu0 0
        %729 = vmatprep.subr.bf16.mxu0 0
        %730 = vmatpush1.bf16.msra.mxu0 0
        %731 = vmatprep.subr.bf16.mxu0 0
        %732 = vmatpush1.bf16.msra.mxu0 0
        %733 = vmatprep.subr.bf16.mxu0 0
        %734 = vmatpush1.bf16.msra.mxu0 0
        %735 = vmatprep.subr.bf16.mxu0 0
        %736 = vmatpush1.bf16.msra.mxu0 0
        %737 = vmatprep.subr.bf16.mxu0 0
        %738 = vmatpush1.bf16.msra.mxu0 0
        %739 = vmatprep.subr.bf16.mxu0 0
        %740 = vmatpush1.bf16.msra.mxu0 0
        %741 = vmatprep.subr.bf16.mxu0 0
        %742 = vmatpush1.bf16.msra.mxu0 0
        %743 = vmatprep.mubr.bf16.mxu0 0
        %744 = vmatmul.mubr.bf16.gmra.mrb[0].mxu0 %v707
        %v745 = vpop.f32.mrb[0].mxu0
        %v746 = vadd.f32 0.0, %v745
        %v747 = vpop.f32.mrb[0].mxu0
        %v748 = vpop.f32.mrb[0].mxu0
        %v749 = vpop.f32.mrb[0].mxu0
        %750 = vdwg.mxu0
        %v751 = vadd.f32 %v677, %v746
        %v752 = vld [vmem:[%s3] sm:$0xff]
        %754 = vset.pattern.permute.xlu0 0
        %755 = vperm.xlu0 %754, %v752
        %v756 = vpop.permute.xlu0 %755
        %v758 = vadd.f32 %v751, %v756
        %v759 = vpack.c.bf16 %v758, %v758
        %760 = vst [vmem:[%s240] sm:$0xf] %v759
        %s761 = sand.u32 %s140, 1
        %s762 = scalar_lea.sflag [#allocation3], %s761
        %s763 = sand.u32 %s140, 1
        %s764 = smul.addr %s763, 4
        %s765 = scalar_lea.vmem [#allocation2], %s764
        // Predicated region
        $region37: #{a_call__.1} parent=35 // pred_check
          %p766 = pneg %p150
        $region38: #{a_call__.1} parent=35 // pred_check_branch
          %768 = sbr.rel (%p766) target = $region40
        $region39: #{a_call__.1} parent=35 // pred_region
          %s770 = ssub.s32 64, 64
          %771 = vsyncadd %s762, %s770
          %s772 = sadd.s32 %s23, %s22
          %s773 = smul.addr %s772, 64
          %s774 = scalar_lea.hbm %s4, %s773
          %s776 = sshll.u32 %s765, 4
          %s777 = int_to_ptr.vmem [resolvable:$true] %s776
          %779 = dma.vmem_to_hbm [thread:$0]  %s777, 64, %s774, %s762
        $region40: #{a_call__.1} parent=35 // pred_fallthru
          _
      $region36: #{a_call__.1} parent=5 // pred_fallthru
        _
      %p780 = scmp.le.s32.totalorder 2, %s13
      // Predicated region
      $region41: #{a_call__.1} parent=5 // pred_check
        %p781 = pneg %p780
      $region42: #{a_call__.1} parent=5 // pred_check_branch
        %783 = sbr.rel (%p781) target = $region44
      $region43: #{a_call__.1} parent=5 // pred_region
        %s784 = ssub.s32 %s13, 2
        // Predicated region
        $region45: #{a_call__.1} parent=43 // pred_check
          %p785 = pneg %p156
        $region46: #{a_call__.1} parent=43 // pred_check_branch
          %787 = sbr.rel (%p785) target = $region48
        $region47: #{a_call__.1} parent=43 // pred_region
          %s788 = sand.u32 %s141, 1
          %s789 = scalar_lea.sflag [#allocation3], %s788
          %s790 = sand.u32 %s141, 1
          %s791 = smul.addr %s790, 4
          %s792 = scalar_lea.vmem [#allocation2], %s791
          %793 = dma.done %s789, 64
        $region48: #{a_call__.1} parent=43 // pred_fallthru
          _
      $region44: #{a_call__.1} parent=5 // pred_fallthru
        _
    $region6: #{a_call__.1} parent=1 // loop_footer
      %s17 = sadd.s32 1, %s13
    $region7: #{a_call__.1} parent=1 // loop_footer_branch
      %12 = sbr.rel target = $region3
    $region8: #{a_call__.1} parent=1 // loop_exit
      _
    %794 = vsyncpa [#allocation3], 1
    %s795 = scalar_lea.sflag [#allocation3], 1
    %796 = vsyncpa %s795, 1

</llo_original>
